<compile_context>
chip_gen: v7x
topology: tpu7x:2x2x1
jax: 0.10.0
libtpu: 0.0.40
codegen_flags: <defaults>
</compile_context>

<pallas_src>
import functools
import math

import jax
import jax.numpy as jnp
from jax import lax
from jax.experimental import pallas as pl
from jax.experimental.pallas import tpu as pltpu


def _round_up(x, m):
    return ((x + m - 1) // m) * m


def _cdiv(a, b):
    return -(-a // b)


def _flash_attention_kernel(q_ref, k_ref, v_ref, o_ref,
                            m_sc, l_sc, acc_sc, *,
                            scale, tk_inner, block_k, n_kblocks, kv_valid,
                            compute_dtype, approx_reciprocal):
    """One (batch, q-tile, kv-block) grid step of flash attention.

    q_ref:   (tq, D)        current query tile
    k_ref:   (block_k, D)   current KV block (the whole padded Tk when it fits VMEM)
    v_ref:   (block_k, Dv)
    o_ref:   (tq, Dv)       output tile (written once, on the last kv block)
    m/l/acc: VMEM scratch carrying the online-softmax state across kv blocks.
    """
    ko = pl.program_id(2)

    @pl.when(ko == 0)
    def _init():
        m_sc[...] = jnp.full_like(m_sc, -jnp.inf)
        l_sc[...] = jnp.zeros_like(l_sc)
        acc_sc[...] = jnp.zeros_like(acc_sc)

    # Scale + (optional) bf16 cast applied ONCE per q tile, hoisted out of the kv loop.
    q = (q_ref[...] * scale).astype(compute_dtype)                  # (tq, D)

    def process_chunk(start, valid_in_chunk):
        """Online-softmax update for one tk_inner-wide chunk of the kv block."""
        k = k_ref[pl.ds(start, tk_inner), :].astype(compute_dtype)  # (tk_inner, D)
        v = v_ref[pl.ds(start, tk_inner), :].astype(compute_dtype)  # (tk_inner, Dv)

        # scores = q . k^T, contracting on the feature axis (MXU, f32 accumulate),
        # no transposed copy of K.
        s = lax.dot_general(q, k, (((1,), (1,)), ((), ())),
                            preferred_element_type=jnp.float32)     # (tq, tk_inner)

        # Mask only the statically-known tail chunk that contains key padding.
        if valid_in_chunk is not None:
            col = lax.broadcasted_iota(jnp.int32, s.shape, 1)
            s = jnp.where(col < valid_in_chunk, s, -1e30)

        m_prev = m_sc[...]
        m_new = jnp.maximum(m_prev, jnp.max(s, axis=-1, keepdims=True))
        alpha = jnp.exp(m_prev - m_new)
        p = jnp.exp(s - m_new)

        l_sc[...] = alpha * l_sc[...] + jnp.sum(p, axis=-1, keepdims=True)
        acc_sc[...] = alpha * acc_sc[...] + lax.dot_general(
            p.astype(compute_dtype), v, (((1,), (0,)), ((), ())),
            preferred_element_type=jnp.float32)
        m_sc[...] = m_new

    def process_block(valid):
        # `valid` is a static Python int: number of real (unpadded) keys in this block.
        n_full = valid // tk_inner
        rem = valid % tk_inner
        if n_full > 0:
            def body(i, carry):
                start = pl.multiple_of(i * tk_inner, tk_inner)
                process_chunk(start, None)            # interior chunks: no mask cost
                return carry
            lax.fori_loop(0, n_full, body, 0)
        if rem > 0:
            process_chunk(n_full * tk_inner, rem)     # single masked tail chunk
        # Chunks consisting entirely of padding are skipped at trace time.

    if n_kblocks == 1:
        process_block(kv_valid)
    else:
        valid_last = kv_valid - (n_kblocks - 1) * block_k

        @pl.when(ko < n_kblocks - 1)
        def _interior():
            process_block(block_k)

        @pl.when(ko == n_kblocks - 1)
        def _last():
            process_block(valid_last)

    @pl.when(ko == n_kblocks - 1)
    def _finalize():
        # Normalize once per output tile.
        inv_l = pl.reciprocal(l_sc[...], approx=approx_reciprocal)
        o_ref[...] = (acc_sc[...] * inv_l).astype(o_ref.dtype)


def dotproduct_attention(queries, keys, values, dropout=0.0,
                         allow_bf16_matmul=True):
    """Pallas flash-attention implementation of Dotproduct_Attention.forward (eval)."""
    B, Tq, D = queries.shape
    Bk, Tk, Dk = keys.shape
    Bv, Tkv, Dv = values.shape
    assert B == Bk == Bv and D == Dk and Tk == Tkv
    del dropout  # eval-mode identity (see TODO at top of file)

    scale = 1.0 / math.sqrt(D)

    # MXU input dtype: exact f32 parity unless the caller opts into the bf16 fast
    # path (f32 accumulation kept either way).
    if queries.dtype == jnp.float32 and allow_bf16_matmul:
        compute_dtype = jnp.bfloat16
        fast_path = True
    else:
        compute_dtype = queries.dtype
        fast_path = queries.dtype == jnp.bfloat16

    # ---- Q tiling: large tiles for arithmetic intensity -----------------------
    tq = min(256, _round_up(Tq, 8))
    Tq_p = _round_up(Tq, tq)
    nq = Tq_p // tq
    # v7x has 2 TensorCores: keep the parallel grid extent >= 2 when possible.
    if B * nq < 2 and Tq > 8:
        tq = _round_up(_cdiv(Tq, 2), 8)
        Tq_p = _round_up(Tq, tq)
        nq = Tq_p // tq

    # ---- KV tiling: big per-grid-step KV blocks, VMEM-resident when they fit ---
    tk_inner = min(512, _round_up(Tk, 128))          # in-kernel chunk (lane-dense scores)
    n_chunks_total = _cdiv(Tk, tk_inner)
    kv_row_bytes = D * keys.dtype.itemsize + Dv * values.dtype.itemsize
    kv_budget = 28 * 1024 * 1024                     # double-buffered K + V blocks
    max_resident_rows = kv_budget // max(1, 2 * kv_row_bytes)
    chunks_per_block = max(1, min(n_chunks_total, max_resident_rows // tk_inner))
    block_k = chunks_per_block * tk_inner
    n_kblocks = _cdiv(n_chunks_total, chunks_per_block)
    Tk_p = n_kblocks * block_k

    # Only time dims are ever padded; feature dims keep their true extent (a block
    # last-dim equal to the full array dim satisfies the (8,128) rule).
    def pad_time(x, t_pad):
        t = x.shape[1]
        if t == t_pad:
            return x
        return jnp.pad(x, ((0, 0), (0, t_pad - t), (0, 0)))

    qp = pad_time(queries, Tq_p)
    kp = pad_time(keys, Tk_p)
    vp = pad_time(values, Tk_p)

    grid = (B, nq, n_kblocks)

    kernel = functools.partial(
        _flash_attention_kernel,
        scale=scale, tk_inner=tk_inner, block_k=block_k,
        n_kblocks=n_kblocks, kv_valid=Tk,
        compute_dtype=compute_dtype, approx_reciprocal=fast_path)

    # VMEM working set from the actual dtypes (double-buffered blocks + scratch +
    # in-kernel f32 temporaries); modest headroom, capped at 48 MiB for v7x (64 MiB).
    est = (2 * tq * D * queries.dtype.itemsize        # Q (double-buffered)
           + 2 * block_k * D * keys.dtype.itemsize    # K block
           + 2 * block_k * Dv * values.dtype.itemsize # V block
           + 2 * tq * Dv * queries.dtype.itemsize     # out block
           + 4 * tq * (Dv + 2)                        # f32 scratch m, l, acc
           + 6 * tq * tk_inner * 4)                   # f32 temporaries (s, p, ...)
    vmem_limit = int(min(48 * 1024 * 1024, 1.5 * est + 8 * 1024 * 1024))

    out = pl.pallas_call(
        kernel,
        out_shape=jax.ShapeDtypeStruct((B, Tq_p, Dv), queries.dtype),
        grid_spec=pltpu.PrefetchScalarGridSpec(
            num_scalar_prefetch=0,
            grid=grid,
            in_specs=[
                pl.BlockSpec((pl.Squeezed(), tq, D),
                             lambda b, qi, ko: (b, qi, 0)),
                pl.BlockSpec((pl.Squeezed(), block_k, D),
                             lambda b, qi, ko: (b, ko, 0)),
                pl.BlockSpec((pl.Squeezed(), block_k, Dv),
                             lambda b, qi, ko: (b, ko, 0)),
            ],
            out_specs=pl.BlockSpec((pl.Squeezed(), tq, Dv),
                                   lambda b, qi, ko: (b, qi, 0)),
            scratch_shapes=[
                pltpu.VMEM((tq, 1), jnp.float32),     # running max   m
                pltpu.VMEM((tq, 1), jnp.float32),     # running sum   l
                pltpu.VMEM((tq, Dv), jnp.float32),    # output accumulator
            ],
        ),
        compiler_params=pltpu.CompilerParams(
            dimension_semantics=("parallel", "parallel", "arbitrary"),
            vmem_limit_bytes=vmem_limit,
        ),
    )(qp, kp, vp)

    if Tq_p != Tq:
        out = out[:, :Tq, :]
    return out


def _reference(queries, keys, values):
    d = queries.shape[-1]
    scores = jnp.einsum("bqd,bkd->bqk", queries, keys) / math.sqrt(d)
    w = jax.nn.softmax(scores, axis=-1)
    return jnp.einsum("bqk,bkd->bqd", w, values)


if __name__ == "__main__":
    key = jax.random.PRNGKey(0)
    kq, kk, kv = jax.random.split(key, 3)

    B, Tq, Tk, D, Dv = 2, 8, 8, 32, 32
    queries = jax.random.normal(kq, (B, Tq, D), dtype=jnp.float32)
    keys = jax.random.normal(kk, (B, Tk, D), dtype=jnp.float32)
    values = jax.random.normal(kv, (B, Tk, Dv), dtype=jnp.float32)

    ref = _reference(queries, keys, values)

    # Exact-parity path (f32 MXU inputs, exact reciprocal).
    out = dotproduct_attention(queries, keys, values, dropout=0.0,
                               allow_bf16_matmul=False)
    out = jax.block_until_ready(out)
    assert out.shape == (B, Tq, Dv)
    assert jnp.allclose(out, ref, atol=1e-3, rtol=1e-3)

    # Fast path (bf16 MXU inputs, f32 accumulation, approx reciprocal) — v6e/v7x.
    out_fast = dotproduct_attention(queries, keys, values, dropout=0.0,
                                    allow_bf16_matmul=True)
    out_fast = jax.block_until_ready(out_fast)
    assert out_fast.shape == (B, Tq, Dv)
    assert jnp.allclose(out_fast, ref, atol=3e-2, rtol=3e-2)

    print("KERNEL_OK")
</pallas_src>

<mosaic_0001>
module attributes {stable_mosaic.version = 11 : i64} {
  func.func @_flash_attention_kernel(%arg0: i32, %arg1: i32, %arg2: i32, %arg3: memref<1x8x32xf32, #tpu.memory_space<vmem>>, %arg4: memref<1x128x32xf32, #tpu.memory_space<vmem>>, %arg5: memref<1x128x32xf32, #tpu.memory_space<vmem>>, %arg6: memref<1x8x32xf32, #tpu.memory_space<vmem>>, %arg7: memref<8x1xf32, #tpu.memory_space<vmem>>, %arg8: memref<8x1xf32, #tpu.memory_space<vmem>>, %arg9: memref<8x32xf32, #tpu.memory_space<vmem>>) attributes {dimension_semantics = [#tpu.dimension_semantics<parallel>, #tpu.dimension_semantics<parallel>, #tpu.dimension_semantics<arbitrary>], iteration_bounds = array<i64: 2, 1, 1>, scalar_prefetch = 0 : i64, scratch_operands = 3 : i64, tpu.core_type = #tpu.core_type<tc>, window_params = [{transform_indices = @transform_0, window_bounds = array<i64: 1, 8, 32>}, {transform_indices = @transform_1, window_bounds = array<i64: 1, 128, 32>}, {transform_indices = @transform_2, window_bounds = array<i64: 1, 128, 32>}, {transform_indices = @transform_3, window_bounds = array<i64: 1, 8, 32>}]} {
    %c0_i32 = arith.constant 0 : i32
    %0 = arith.cmpi eq, %arg2, %c0_i32 : i32
    %1 = arith.extui %0 : i1 to i32
    %c0_i32_0 = arith.constant 0 : i32
    %2 = arith.cmpi ne, %1, %c0_i32_0 : i32
    scf.if %2 {
      %cst_28 = arith.constant 0xFF800000 : f32
      %42 = vector.broadcast %cst_28 : f32 to vector<8x1xf32>
      %c0_29 = arith.constant 0 : index
      %c0_30 = arith.constant 0 : index
      %43 = vector.load %arg7[%c0_29, %c0_30] : memref<8x1xf32, #tpu.memory_space<vmem>>, vector<8x1xf32>
      tpu.vector_store %arg7[%c0_29, %c0_30], %42 {strides = array<i32>} : memref<8x1xf32, #tpu.memory_space<vmem>>, vector<8x1xf32>,
      %cst_31 = arith.constant 0.000000e+00 : f32
      %44 = vector.broadcast %cst_31 : f32 to vector<8x1xf32>
      %c0_32 = arith.constant 0 : index
      %c0_33 = arith.constant 0 : index
      %45 = vector.load %arg8[%c0_32, %c0_33] : memref<8x1xf32, #tpu.memory_space<vmem>>, vector<8x1xf32>
      tpu.vector_store %arg8[%c0_32, %c0_33], %44 {strides = array<i32>} : memref<8x1xf32, #tpu.memory_space<vmem>>, vector<8x1xf32>,
      %cst_34 = arith.constant 0.000000e+00 : f32
      %46 = vector.broadcast %cst_34 : f32 to vector<8x32xf32>
      %c0_35 = arith.constant 0 : index
      %c0_36 = arith.constant 0 : index
      %47 = vector.load %arg9[%c0_35, %c0_36] : memref<8x32xf32, #tpu.memory_space<vmem>>, vector<8x32xf32>
      tpu.vector_store %arg9[%c0_35, %c0_36], %46 {strides = array<i32>} : memref<8x32xf32, #tpu.memory_space<vmem>>, vector<8x32xf32>,
    } else {
    }
    %c0 = arith.constant 0 : index
    %c0_1 = arith.constant 0 : index
    %c0_2 = arith.constant 0 : index
    %3 = vector.load %arg3[%c0, %c0_1, %c0_2] : memref<1x8x32xf32, #tpu.memory_space<vmem>>, vector<1x8x32xf32>
    %4 = vector.shape_cast %3 : vector<1x8x32xf32> to vector<8x32xf32>
    %cst = arith.constant 0.176776692 : f32
    %5 = vector.broadcast %cst : f32 to vector<8x32xf32>
    %6 = arith.mulf %4, %5 : vector<8x32xf32>
    %c0_3 = arith.constant 0 : index
    %c0_4 = arith.constant 0 : index
    %c0_5 = arith.constant 0 : index
    %7 = vector.load %arg4[%c0_3, %c0_4, %c0_5] : memref<1x128x32xf32, #tpu.memory_space<vmem>>, vector<1x128x32xf32>
    %8 = vector.shape_cast %7 : vector<1x128x32xf32> to vector<128x32xf32>
    %c0_6 = arith.constant 0 : index
    %c0_7 = arith.constant 0 : index
    %c0_8 = arith.constant 0 : index
    %9 = vector.load %arg5[%c0_6, %c0_7, %c0_8] : memref<1x128x32xf32, #tpu.memory_space<vmem>>, vector<1x128x32xf32>
    %10 = vector.shape_cast %9 : vector<1x128x32xf32> to vector<128x32xf32>
    %cst_9 = arith.constant dense<0.000000e+00> : vector<8x128xf32>
    %11 = tpu.matmul %6, %8, %cst_9 {dimension_numbers = #tpu.dot_dimension_numbers<[1], [1], [0], [0], [0, 0, 1, 0], [], []>} : vector<8x32xf32>, vector<128x32xf32>, vector<8x128xf32> -> vector<8x128xf32>
    %12 = tpu.iota {dimensions = array<i32: 1>} : vector<8x128xi32>
    %c8_i32 = arith.constant 8 : i32
    %13 = vector.broadcast %c8_i32 : i32 to vector<8x128xi32>
    %14 = arith.cmpi slt, %12, %13 : vector<8x128xi32>
    %cst_10 = arith.constant -1.000000e+30 : f32
    %15 = vector.broadcast %cst_10 : f32 to vector<8x128xf32>
    %16 = arith.select %14, %11, %15 : vector<8x128xi1>, vector<8x128xf32>
    %c0_11 = arith.constant 0 : index
    %c0_12 = arith.constant 0 : index
    %17 = vector.load %arg7[%c0_11, %c0_12] : memref<8x1xf32, #tpu.memory_space<vmem>>, vector<8x1xf32>
    %cst_13 = arith.constant dense<0xFF800000> : vector<8xf32>
    %18 = vector.multi_reduction <maximumf>, %16, %cst_13 [1] : vector<8x128xf32> to vector<8xf32>
    %19 = vector.shape_cast %18 : vector<8xf32> to vector<8x1xf32>
    %20 = arith.maximumf %17, %19 : vector<8x1xf32>
    %21 = arith.subf %17, %20 : vector<8x1xf32>
    %22 = math.exp %21 : vector<8x1xf32>
    %23 = vector.broadcast %20 : vector<8x1xf32> to vector<8x128xf32>
    %24 = arith.subf %16, %23 : vector<8x128xf32>
    %25 = math.exp %24 : vector<8x128xf32>
    %c0_14 = arith.constant 0 : index
    %c0_15 = arith.constant 0 : index
    %26 = vector.load %arg8[%c0_14, %c0_15] : memref<8x1xf32, #tpu.memory_space<vmem>>, vector<8x1xf32>
    %27 = arith.mulf %22, %26 : vector<8x1xf32>
    %cst_16 = arith.constant dense<0.000000e+00> : vector<8xf32>
    %28 = vector.multi_reduction <add>, %25, %cst_16 [1] : vector<8x128xf32> to vector<8xf32>
    %29 = vector.shape_cast %28 : vector<8xf32> to vector<8x1xf32>
    %30 = arith.addf %27, %29 : vector<8x1xf32>
    %c0_17 = arith.constant 0 : index
    %c0_18 = arith.constant 0 : index
    %31 = vector.load %arg8[%c0_17, %c0_18] : memref<8x1xf32, #tpu.memory_space<vmem>>, vector<8x1xf32>
    tpu.vector_store %arg8[%c0_17, %c0_18], %30 {strides = array<i32>} : memref<8x1xf32, #tpu.memory_space<vmem>>, vector<8x1xf32>,
    %c0_19 = arith.constant 0 : index
    %c0_20 = arith.constant 0 : index
    %32 = vector.load %arg9[%c0_19, %c0_20] : memref<8x32xf32, #tpu.memory_space<vmem>>, vector<8x32xf32>
    %33 = vector.broadcast %22 : vector<8x1xf32> to vector<8x32xf32>
    %34 = arith.mulf %33, %32 : vector<8x32xf32>
    %cst_21 = arith.constant dense<0.000000e+00> : vector<8x32xf32>
    %35 = tpu.matmul %25, %10, %cst_21 {dimension_numbers = #tpu.dot_dimension_numbers<[1], [0], [0], [1], [0, 0, 1, 1], [], []>} : vector<8x128xf32>, vector<128x32xf32>, vector<8x32xf32> -> vector<8x32xf32>
    %36 = arith.addf %34, %35 : vector<8x32xf32>
    %c0_22 = arith.constant 0 : index
    %c0_23 = arith.constant 0 : index
    %37 = vector.load %arg9[%c0_22, %c0_23] : memref<8x32xf32, #tpu.memory_space<vmem>>, vector<8x32xf32>
    tpu.vector_store %arg9[%c0_22, %c0_23], %36 {strides = array<i32>} : memref<8x32xf32, #tpu.memory_space<vmem>>, vector<8x32xf32>,
    %c0_24 = arith.constant 0 : index
    %c0_25 = arith.constant 0 : index
    %38 = vector.load %arg7[%c0_24, %c0_25] : memref<8x1xf32, #tpu.memory_space<vmem>>, vector<8x1xf32>
    tpu.vector_store %arg7[%c0_24, %c0_25], %20 {strides = array<i32>} : memref<8x1xf32, #tpu.memory_space<vmem>>, vector<8x1xf32>,
    %c0_i32_26 = arith.constant 0 : i32
    %39 = arith.cmpi eq, %arg2, %c0_i32_26 : i32
    %40 = arith.extui %39 : i1 to i32
    %c0_i32_27 = arith.constant 0 : i32
    %41 = arith.cmpi ne, %40, %c0_i32_27 : i32
    scf.if %41 {
      %c0_28 = arith.constant 0 : index
      %c0_29 = arith.constant 0 : index
      %42 = vector.load %arg8[%c0_28, %c0_29] : memref<8x1xf32, #tpu.memory_space<vmem>>, vector<8x1xf32>
      %43 = tpu.reciprocal %42 : vector<8x1xf32> -> vector<8x1xf32>
      %c0_30 = arith.constant 0 : index
      %c0_31 = arith.constant 0 : index
      %44 = vector.load %arg9[%c0_30, %c0_31] : memref<8x32xf32, #tpu.memory_space<vmem>>, vector<8x32xf32>
      %45 = vector.broadcast %43 : vector<8x1xf32> to vector<8x32xf32>
      %46 = arith.mulf %44, %45 : vector<8x32xf32>
      %c0_32 = arith.constant 0 : index
      %c0_33 = arith.constant 0 : index
      %c0_34 = arith.constant 0 : index
      %47 = vector.load %arg6[%c0_32, %c0_33, %c0_34] : memref<1x8x32xf32, #tpu.memory_space<vmem>>, vector<1x8x32xf32>
      %48 = vector.shape_cast %47 : vector<1x8x32xf32> to vector<8x32xf32>
      %49 = vector.shape_cast %46 : vector<8x32xf32> to vector<1x8x32xf32>
      tpu.vector_store %arg6[%c0_32, %c0_33, %c0_34], %49 {strides = array<i32>} : memref<1x8x32xf32, #tpu.memory_space<vmem>>, vector<1x8x32xf32>,
    } else {
    }
    return
  }
  func.func @transform_0(%arg0: i32, %arg1: i32, %arg2: i32) -> (i32, i32, i32) {
    %c0_i32 = arith.constant 0 : i32
    %c0_i32_0 = arith.constant 0 : i32
    return %arg0, %arg1, %c0_i32 : i32, i32, i32
  }
  func.func @transform_1(%arg0: i32, %arg1: i32, %arg2: i32) -> (i32, i32, i32) {
    %c0_i32 = arith.constant 0 : i32
    %c0_i32_0 = arith.constant 0 : i32
    return %arg0, %arg2, %c0_i32 : i32, i32, i32
  }
  func.func @transform_2(%arg0: i32, %arg1: i32, %arg2: i32) -> (i32, i32, i32) {
    %c0_i32 = arith.constant 0 : i32
    %c0_i32_0 = arith.constant 0 : i32
    return %arg0, %arg2, %c0_i32 : i32, i32, i32
  }
  func.func @transform_3(%arg0: i32, %arg1: i32, %arg2: i32) -> (i32, i32, i32) {
    %c0_i32 = arith.constant 0 : i32
    %c0_i32_0 = arith.constant 0 : i32
    return %arg0, %arg1, %c0_i32 : i32, i32, i32
  }
}

</mosaic_0001>

<llo_original>
// kernel: tpu_custom_call.1
$region0: #{tpu_custom_call.1}
  #allocation0 [shape = 'u32[]', space=smem, size = 0x4, offset = 0x4, fixed_abs, tag = 'smem constant byte address 0x4 - core index']
  #allocation1 [shape = 'u32[144,128]{1,0:T(1,128)}', space=vmem, size = 0x12000, scoped, tag = 'internal scratch']
  #allocation2 [shape = 'f32[8,1]{1,0:T(8,128)}', space=vmem, size = 0x1000, scoped, tag = 'scratch operand']
  #allocation3 [shape = 'f32[8,1]{1,0:T(8,128)}', space=vmem, size = 0x1000, scoped, tag = 'scratch operand']
  #allocation4 [shape = 'f32[8,32]{1,0:T(8,128)}', space=vmem, size = 0x1000, scoped, tag = 'scratch operand']
  %s0 = inlined_call_operand.vmem [shape: f32[2,8,32], index: 0, kind: input, shape index: {}]
  %s1 = inlined_call_operand.vmem [shape: f32[2,128,32], index: 1, kind: input, shape index: {}]
  %s2 = inlined_call_operand.vmem [shape: f32[2,128,32], index: 2, kind: input, shape index: {}]
  %s3 = inlined_call_operand.hbm [shape: f32[2,8,32], index: 3, kind: output, shape index: {}]
  %s4 = sld [smem:[#allocation0]]
  $region53: #{tpu_custom_call.1} parent=0
    _
  %s6 = ssub.s32 1, %s4
  %s7 = scalar_select 0, %s6, %s4
  $region1: #{tpu_custom_call.1} parent=0
    #allocation5 [shape = 'u8[8192]{0}', space=vmem, size = 0x2000, scoped, tag = 'output window, operand 0']
    #allocation6 [shape = 's32[2]{0}', space=sflag, size = 0x8, scoped, tag = 'scoped memory for tpu_custom_call.1']
    %8 = vsyncpa [#allocation6], 0
    %s9 = scalar_lea.sflag [#allocation6], 1
    %10 = vsyncpa %s9, 0
    loop: start=0, step=1, limit=4
    $region2: #{tpu_custom_call.1} parent=1 // loop_pre_header
      _
    $region3: #{tpu_custom_call.1} parent=1 // loop_header
      %s12 = sphi 0, %s16
      %p13 = scmp.ge.s32.totalorder %s12, 4
      %s19 = sphi 0, %s38
      %s20 = sphi 0, %s34
      %s21 = sphi 0, %s30
      %s22 = sphi 0, %s19
      %s23 = sphi 0, %s20
      %s24 = sphi 0, %s21
      %s25 = sphi 0, %s22
      %s26 = sphi 0, %s23
      %s27 = sphi 0, %s24
      %s43 = sphi 0, %s45
      %s46 = sphi 0, %s43
      %s47 = sphi 0, %s46
      %s63 = sphi 0, %s47
      %s71 = sphi 0, %s73
      %s74 = sphi 0, %s71
      %s75 = sphi 0, %s74
      %s91 = sphi 0, %s75
      %s99 = sphi 0, %s101
      %s102 = sphi 0, %s99
      %s103 = sphi 0, %s102
      %s119 = sphi 0, %s103
      %s127 = sphi 0, %s129
      %s130 = sphi 0, %s127
      %s131 = sphi 0, %s130
      %s147 = sphi 0, %s131
    $region4: #{tpu_custom_call.1} parent=1 // loop_header_branch
      %15 = sbr.rel (%p13) target = $region8
    $region5: #{tpu_custom_call.1} parent=1 // loop_body
      %s17 = ssub.s32 %s12, 1
      %s18 = ssub.s32 %s12, 2
      %s28 = sadd.s32 1, %s21
      %p29 = scmp.ge.s32.totalorder %s28, 1
      %s30 = scalar_select %p29, 0, %s28
      %s31 = sadd.s32 1, %s20
      %s32 = scalar_select %p29, %s31, %s20
      %p33 = scmp.ge.s32.totalorder %s32, 1
      %s34 = scalar_select %p33, 0, %s32
      %s35 = sadd.s32 1, %s19
      %s36 = scalar_select %p33, %s35, %s19
      %p37 = scmp.ge.s32.totalorder %s36, 2
      %s38 = scalar_select %p37, 0, %s36
      %s39 = ssub.s32 %s19, %s38
      %s40 = ssub.s32 %s20, %s34
      %s41 = sor.u32 %s39, %s40
      %p42 = scmp.eq.s32.totalorder %s41, 0
      %s44 = sadd.s32 %s43, 1
      %s45 = scalar_select %p42, %s43, %s44
      %p48 = pneg %p42
      %p49 = scmp.eq.s32.totalorder %s12, 1
      %p50 = por %p48, %p49
      %p51 = scmp.ne.s32.totalorder %s43, %s46
      %p52 = scmp.eq.s32.totalorder %s12, 0
      %p53 = por %p51, %p52
      %p54 = scmp.ne.s32.totalorder %s43, %s46
      %p55 = scmp.eq.s32.totalorder %s17, 1
      %p56 = por %p54, %p55
      %p57 = scmp.ne.s32.totalorder %s46, %s47
      %p58 = scmp.eq.s32.totalorder %s17, 0
      %p59 = por %p57, %p58
      %p60 = scmp.ne.s32.totalorder %s46, %s47
      %p61 = scmp.eq.s32.totalorder %s18, 1
      %p62 = por %p60, %p61
      %p64 = scmp.ne.s32.totalorder %s47, %s63
      %p65 = scmp.eq.s32.totalorder %s18, 0
      %p66 = por %p64, %p65
      %s67 = ssub.s32 %s19, %s38
      %s68 = ssub.s32 %s21, %s30
      %s69 = sor.u32 %s67, %s68
      %p70 = scmp.eq.s32.totalorder %s69, 0
      %s72 = sadd.s32 %s71, 1
      %s73 = scalar_select %p70, %s71, %s72
      %p76 = pneg %p70
      %p77 = scmp.eq.s32.totalorder %s12, 1
      %p78 = por %p76, %p77
      %p79 = scmp.ne.s32.totalorder %s71, %s74
      %p80 = scmp.eq.s32.totalorder %s12, 0
      %p81 = por %p79, %p80
      %p82 = scmp.ne.s32.totalorder %s71, %s74
      %p83 = scmp.eq.s32.totalorder %s17, 1
      %p84 = por %p82, %p83
      %p85 = scmp.ne.s32.totalorder %s74, %s75
      %p86 = scmp.eq.s32.totalorder %s17, 0
      %p87 = por %p85, %p86
      %p88 = scmp.ne.s32.totalorder %s74, %s75
      %p89 = scmp.eq.s32.totalorder %s18, 1
      %p90 = por %p88, %p89
      %p92 = scmp.ne.s32.totalorder %s75, %s91
      %p93 = scmp.eq.s32.totalorder %s18, 0
      %p94 = por %p92, %p93
      %s95 = ssub.s32 %s19, %s38
      %s96 = ssub.s32 %s21, %s30
      %s97 = sor.u32 %s95, %s96
      %p98 = scmp.eq.s32.totalorder %s97, 0
      %s100 = sadd.s32 %s99, 1
      %s101 = scalar_select %p98, %s99, %s100
      %p104 = pneg %p98
      %p105 = scmp.eq.s32.totalorder %s12, 1
      %p106 = por %p104, %p105
      %p107 = scmp.ne.s32.totalorder %s99, %s102
      %p108 = scmp.eq.s32.totalorder %s12, 0
      %p109 = por %p107, %p108
      %p110 = scmp.ne.s32.totalorder %s99, %s102
      %p111 = scmp.eq.s32.totalorder %s17, 1
      %p112 = por %p110, %p111
      %p113 = scmp.ne.s32.totalorder %s102, %s103
      %p114 = scmp.eq.s32.totalorder %s17, 0
      %p115 = por %p113, %p114
      %p116 = scmp.ne.s32.totalorder %s102, %s103
      %p117 = scmp.eq.s32.totalorder %s18, 1
      %p118 = por %p116, %p117
      %p120 = scmp.ne.s32.totalorder %s103, %s119
      %p121 = scmp.eq.s32.totalorder %s18, 0
      %p122 = por %p120, %p121
      %s123 = ssub.s32 %s19, %s38
      %s124 = ssub.s32 %s20, %s34
      %s125 = sor.u32 %s123, %s124
      %p126 = scmp.eq.s32.totalorder %s125, 0
      %s128 = sadd.s32 %s127, 1
      %s129 = scalar_select %p126, %s127, %s128
      %p132 = pneg %p126
      %p133 = scmp.eq.s32.totalorder %s12, 1
      %p134 = por %p132, %p133
      %p135 = scmp.ne.s32.totalorder %s127, %s130
      %p136 = scmp.eq.s32.totalorder %s12, 0
      %p137 = por %p135, %p136
      %p138 = scmp.ne.s32.totalorder %s127, %s130
      %p139 = scmp.eq.s32.totalorder %s17, 1
      %p140 = por %p138, %p139
      %p141 = scmp.ne.s32.totalorder %s130, %s131
      %p142 = scmp.eq.s32.totalorder %s17, 0
      %p143 = por %p141, %p142
      %p144 = scmp.ne.s32.totalorder %s130, %s131
      %p145 = scmp.eq.s32.totalorder %s18, 1
      %p146 = por %p144, %p145
      %p148 = scmp.ne.s32.totalorder %s131, %s147
      %p149 = scmp.eq.s32.totalorder %s18, 0
      %p150 = por %p148, %p149
      %p151 = scmp.le.s32.totalorder 1, %s12
      %p152 = scmp.lt.s32.totalorder %s12, 3
      %p153 = pnand %p151, %p152
      %p154 = pneg %p153
      // Predicated region
      $region9: #{tpu_custom_call.1} parent=5 // pred_check
        _
      $region10: #{tpu_custom_call.1} parent=5 // pred_check_branch
        %156 = sbr.rel (%p153) target = $region12
      $region11: #{tpu_custom_call.1} parent=5 // pred_region
        %s157 = ssub.s32 %s12, 1
      $region12: #{tpu_custom_call.1} parent=5 // pred_fallthru
        _
      %p158 = scmp.lt.s32.totalorder %s12, 2
      // Predicated region
      $region13: #{tpu_custom_call.1} parent=5 // pred_check
        %p159 = pneg %p158
      $region14: #{tpu_custom_call.1} parent=5 // pred_check_branch
        %161 = sbr.rel (%p159) target = $region16
      $region15: #{tpu_custom_call.1} parent=5 // pred_region
        // Predicated region
        $region17: #{tpu_custom_call.1} parent=15 // pred_check
          %p162 = pneg %p53
        $region18: #{tpu_custom_call.1} parent=15 // pred_check_branch
          %164 = sbr.rel (%p162) target = $region20
        $region19: #{tpu_custom_call.1} parent=15 // pred_region
          %p165 = scmp.lt.s32.totalorder %s19, 1
          %s166 = scalar_select %p165, %s19, 1
          %p167 = scmp.lt.s32.totalorder %s20, 0
          %s168 = scalar_select %p167, %s20, 0
          %s169 = sadd.s32 %s168, %s166
          %s170 = smul.addr %s169, 8
          %s171 = scalar_lea.vmem %s0, %s170
        $region20: #{tpu_custom_call.1} parent=15 // pred_fallthru
          _
        // Predicated region
        $region21: #{tpu_custom_call.1} parent=15 // pred_check
          %p172 = pneg %p81
        $region22: #{tpu_custom_call.1} parent=15 // pred_check_branch
          %174 = sbr.rel (%p172) target = $region24
        $region23: #{tpu_custom_call.1} parent=15 // pred_region
          %s175 = smul.u32 16, %s21
          %p176 = scmp.lt.s32.totalorder %s19, 1
          %s177 = scalar_select %p176, %s19, 1
          %p178 = scmp.lt.s32.totalorder %s175, 15
          %s179 = scalar_select %p178, %s175, 15
          %s180 = smul.addr %s177, 16
          %s181 = sadd.s32 %s179, %s180
          %s182 = smul.addr %s181, 8
          %s183 = scalar_lea.vmem %s1, %s182
          %s184 = smul.u32 16, %s21
        $region24: #{tpu_custom_call.1} parent=15 // pred_fallthru
          _
        // Predicated region
        $region25: #{tpu_custom_call.1} parent=15 // pred_check
          %p185 = pneg %p109
        $region26: #{tpu_custom_call.1} parent=15 // pred_check_branch
          %187 = sbr.rel (%p185) target = $region28
        $region27: #{tpu_custom_call.1} parent=15 // pred_region
          %s188 = smul.u32 16, %s21
          %p189 = scmp.lt.s32.totalorder %s19, 1
          %s190 = scalar_select %p189, %s19, 1
          %p191 = scmp.lt.s32.totalorder %s188, 15
          %s192 = scalar_select %p191, %s188, 15
          %s193 = smul.addr %s190, 16
          %s194 = sadd.s32 %s192, %s193
          %s195 = smul.addr %s194, 8
          %s196 = scalar_lea.vmem %s2, %s195
          %s197 = smul.u32 16, %s21
        $region28: #{tpu_custom_call.1} parent=15 // pred_fallthru
          _
      $region16: #{tpu_custom_call.1} parent=5 // pred_fallthru
        _
      %p198 = scmp.le.s32.totalorder 1, %s12
      %p199 = scmp.lt.s32.totalorder %s12, 3
      %p200 = pnand %p198, %p199
      %p201 = pneg %p200
      // Predicated region
      $region29: #{tpu_custom_call.1} parent=5 // pred_check
        _
      $region30: #{tpu_custom_call.1} parent=5 // pred_check_branch
        %203 = sbr.rel (%p200) target = $region32
      $region31: #{tpu_custom_call.1} parent=5 // pred_region
        %s204 = ssub.s32 %s12, 1
        %p205 = scmp.lt.s32.totalorder %s22, 1
        %s206 = scalar_select %p205, %s22, 1
        %p207 = scmp.lt.s32.totalorder %s23, 0
        %s208 = scalar_select %p207, %s23, 0
        %s209 = sadd.s32 %s208, %s206
        %s210 = smul.addr %s209, 8
        %s211 = scalar_lea.vmem %s0, %s210
        %p212 = pneg %p59
        %p213 = pneg %p56
        %s214 = smul.u32 16, %s24
        %p215 = scmp.lt.s32.totalorder %s22, 1
        %s216 = scalar_select %p215, %s22, 1
        %p217 = scmp.lt.s32.totalorder %s214, 15
        %s218 = scalar_select %p217, %s214, 15
        %s219 = smul.addr %s216, 16
        %s220 = sadd.s32 %s218, %s219
        %s221 = smul.addr %s220, 8
        %s222 = scalar_lea.vmem %s1, %s221
        %p223 = pneg %p87
        %p224 = pneg %p84
        %s225 = smul.u32 16, %s24
        %p226 = scmp.lt.s32.totalorder %s22, 1
        %s227 = scalar_select %p226, %s22, 1
        %p228 = scmp.lt.s32.totalorder %s225, 15
        %s229 = scalar_select %p228, %s225, 15
        %s230 = smul.addr %s227, 16
        %s231 = sadd.s32 %s229, %s230
        %s232 = smul.addr %s231, 8
        %s233 = scalar_lea.vmem %s2, %s232
        %p234 = pneg %p115
        %p235 = pneg %p112
        %p236 = pneg %p143
        %p237 = pneg %p140
        %s238 = sand.u32 %s130, 1
        %s239 = scalar_lea.sflag [#allocation6], %s238
        %s240 = sand.u32 %s130, 1
        %s241 = smul.addr %s240, 8
        %s242 = scalar_lea.vmem [#allocation5], %s241
        %p243 = scmp.lt.s32.totalorder %s22, 1
        %s244 = scalar_select %p243, %s22, 1
        %p245 = scmp.lt.s32.totalorder %s23, 0
        %s246 = scalar_select %p245, %s23, 0
        %s247 = sadd.s32 %s246, %s244
        %s248 = smul.addr %s247, 8
        %s249 = scalar_lea.vmem %s0, %s248
        %s250 = smul.u32 16, %s24
        %p251 = scmp.lt.s32.totalorder %s22, 1
        %s252 = scalar_select %p251, %s22, 1
        %p253 = scmp.lt.s32.totalorder %s250, 15
        %s254 = scalar_select %p253, %s250, 15
        %s255 = smul.addr %s252, 16
        %s256 = sadd.s32 %s254, %s255
        %s257 = smul.addr %s256, 8
        %s258 = scalar_lea.vmem %s1, %s257
        %s259 = smul.u32 16, %s24
        %s260 = smul.u32 16, %s24
        %p261 = scmp.lt.s32.totalorder %s22, 1
        %s262 = scalar_select %p261, %s22, 1
        %p263 = scmp.lt.s32.totalorder %s260, 15
        %s264 = scalar_select %p263, %s260, 15
        %s265 = smul.addr %s262, 16
        %s266 = sadd.s32 %s264, %s265
        %s267 = smul.addr %s266, 8
        %s268 = scalar_lea.vmem %s2, %s267
        %s269 = smul.u32 16, %s24
        %p270 = scmp.eq.s32.totalorder %s24, 0
        // Predicated region
        $region33: #{tpu_custom_call.1} parent=31 // pred_check
          %p271 = pneg %p270
        $region34: #{tpu_custom_call.1} parent=31 // pred_check_branch
          %273 = sbr.rel (%p271) target = $region36
        $region35: #{tpu_custom_call.1} parent=31 // pred_region
          %vm274 = vcmask 7168
          %275 = vst.msk [vmem:[#allocation2] sm:$0xff] %vm274, -inf
          %276 = vst.msk [vmem:[#allocation3] sm:$0xff] %vm274, 0.0
          %vm277 = vcmask 261120
          %278 = vst.msk [vmem:[#allocation4] sm:$0xff] %vm277, 0.0
        $region36: #{tpu_custom_call.1} parent=31 // pred_fallthru
          _
        %v279 = vld [vmem:[%s249] sm:$0xff]
        %v280 = vmul.f32 %v279, 0.17677669
        %v281 = vld [vmem:[%s258] sm:$0xff]
        %v282 = vld [vmem:[%s258 + $0x8] sm:$0xff]
        %v283 = vld [vmem:[%s258 + $0x10] sm:$0xff]
        %v284 = vld [vmem:[%s258 + $0x18] sm:$0xff]
        %v285 = vld [vmem:[%s258 + $0x20] sm:$0xff]
        %v286 = vld [vmem:[%s258 + $0x28] sm:$0xff]
        %v287 = vld [vmem:[%s258 + $0x30] sm:$0xff]
        %v288 = vld [vmem:[%s258 + $0x38] sm:$0xff]
        %v289 = vld [vmem:[%s258 + $0x40] sm:$0xff]
        %v290 = vld [vmem:[%s258 + $0x48] sm:$0xff]
        %v291 = vld [vmem:[%s258 + $0x50] sm:$0xff]
        %v292 = vld [vmem:[%s258 + $0x58] sm:$0xff]
        %v293 = vld [vmem:[%s258 + $0x60] sm:$0xff]
        %v294 = vld [vmem:[%s258 + $0x68] sm:$0xff]
        %v295 = vld [vmem:[%s258 + $0x70] sm:$0xff]
        %v296 = vld [vmem:[%s258 + $0x78] sm:$0xff]
        %v297 = vld [vmem:[%s268] sm:$0xff]
        %v298 = vld [vmem:[%s268 + $0x8] sm:$0xff]
        %v299 = vld [vmem:[%s268 + $0x10] sm:$0xff]
        %v300 = vld [vmem:[%s268 + $0x18] sm:$0xff]
        %v301 = vld [vmem:[%s268 + $0x20] sm:$0xff]
        %v302 = vld [vmem:[%s268 + $0x28] sm:$0xff]
        %v303 = vld [vmem:[%s268 + $0x30] sm:$0xff]
        %v304 = vld [vmem:[%s268 + $0x38] sm:$0xff]
        %v305 = vld [vmem:[%s268 + $0x40] sm:$0xff]
        %v306 = vld [vmem:[%s268 + $0x48] sm:$0xff]
        %v307 = vld [vmem:[%s268 + $0x50] sm:$0xff]
        %v308 = vld [vmem:[%s268 + $0x58] sm:$0xff]
        %v309 = vld [vmem:[%s268 + $0x60] sm:$0xff]
        %v310 = vld [vmem:[%s268 + $0x68] sm:$0xff]
        %v311 = vld [vmem:[%s268 + $0x70] sm:$0xff]
        %v312 = vld [vmem:[%s268 + $0x78] sm:$0xff]
        %vm313 = vcmask 261120
        %v315 = vsel %vm313, %v280, 0
        %v318 = vsel %vm313, %v281, 0
        %v321 = vsel %vm313, %v282, 0
        %v324 = vsel %vm313, %v283, 0
        %v327 = vsel %vm313, %v284, 0
        %v330 = vsel %vm313, %v285, 0
        %v333 = vsel %vm313, %v286, 0
        %v336 = vsel %vm313, %v287, 0
        %v339 = vsel %vm313, %v288, 0
        %v342 = vsel %vm313, %v289, 0
        %v345 = vsel %vm313, %v290, 0
        %v348 = vsel %vm313, %v291, 0
        %v351 = vsel %vm313, %v292, 0
        %v354 = vsel %vm313, %v293, 0
        %v357 = vsel %vm313, %v294, 0
        %v360 = vsel %vm313, %v295, 0
        %v363 = vsel %vm313, %v296, 0
        %365 = vmatprep.subr.mxu0 0.0
        %366 = vmatpush1.xpose.msra.mxu0 %v318
        %367 = vmatprep.subr.mxu0 0.0
        %368 = vmatpush1.xpose.msra.mxu0 %v321
        %369 = vmatprep.subr.mxu0 0.0
        %370 = vmatpush1.xpose.msra.mxu0 %v324
        %371 = vmatprep.subr.mxu0 0.0
        %372 = vmatpush1.xpose.msra.mxu0 %v327
        %373 = vmatprep.subr.mxu0 0.0
        %374 = vmatpush1.xpose.msra.mxu0 %v330
        %375 = vmatprep.subr.mxu0 0.0
        %376 = vmatpush1.xpose.msra.mxu0 %v333
        %377 = vmatprep.subr.mxu0 0.0
        %378 = vmatpush1.xpose.msra.mxu0 %v336
        %379 = vmatprep.subr.mxu0 0.0
        %380 = vmatpush1.xpose.msra.mxu0 %v339
        %381 = vmatprep.subr.mxu0 0.0
        %382 = vmatpush1.xpose.msra.mxu0 %v342
        %383 = vmatprep.subr.mxu0 0.0
        %384 = vmatpush1.xpose.msra.mxu0 %v345
        %385 = vmatprep.subr.mxu0 0.0
        %386 = vmatpush1.xpose.msra.mxu0 %v348
        %387 = vmatprep.subr.mxu0 0.0
        %388 = vmatpush1.xpose.msra.mxu0 %v351
        %389 = vmatprep.subr.mxu0 0.0
        %390 = vmatpush1.xpose.msra.mxu0 %v354
        %391 = vmatprep.subr.mxu0 0.0
        %392 = vmatpush1.xpose.msra.mxu0 %v357
        %393 = vmatprep.subr.mxu0 0.0
        %394 = vmatpush1.xpose.msra.mxu0 %v360
        %395 = vmatprep.subr.mxu0 0.0
        %396 = vmatpush1.xpose.msra.mxu0 %v363
        %397 = vmatprep.subr.mxu0 0.0
        %398 = vmatpush1.xpose.msra.mxu0 0.0
        %399 = vmatprep.subr.mxu0 0.0
        %400 = vmatpush1.xpose.msra.mxu0 0.0
        %401 = vmatprep.subr.mxu0 0.0
        %402 = vmatpush1.xpose.msra.mxu0 0.0
        %403 = vmatprep.subr.mxu0 0.0
        %404 = vmatpush1.xpose.msra.mxu0 0.0
        %405 = vmatprep.subr.mxu0 0.0
        %406 = vmatpush1.xpose.msra.mxu0 0.0
        %407 = vmatprep.subr.mxu0 0.0
        %408 = vmatpush1.xpose.msra.mxu0 0.0
        %409 = vmatprep.subr.mxu0 0.0
        %410 = vmatpush1.xpose.msra.mxu0 0.0
        %411 = vmatprep.subr.mxu0 0.0
        %412 = vmatpush1.xpose.msra.mxu0 0.0
        %413 = vmatprep.subr.mxu0 0.0
        %414 = vmatpush1.xpose.msra.mxu0 0.0
        %415 = vmatprep.subr.mxu0 0.0
        %416 = vmatpush1.xpose.msra.mxu0 0.0
        %417 = vmatprep.subr.mxu0 0.0
        %418 = vmatpush1.xpose.msra.mxu0 0.0
        %419 = vmatprep.subr.mxu0 0.0
        %420 = vmatpush1.xpose.msra.mxu0 0.0
        %421 = vmatprep.subr.mxu0 0.0
        %422 = vmatpush1.xpose.msra.mxu0 0.0
        %423 = vmatprep.subr.mxu0 0.0
        %424 = vmatpush1.xpose.msra.mxu0 0.0
        %425 = vmatprep.subr.mxu0 0.0
        %426 = vmatpush1.xpose.msra.mxu0 0.0
        %427 = vmatprep.subr.mxu0 0.0
        %428 = vmatpush1.xpose.msra.mxu0 0.0
        %429 = vmatprep.mubr.f32.mxu0 0.0
        %430 = vmatmul.mubr.f32.gmra.mrb[0].mxu0 %v315
        %v431 = vpop.f32.mrb[0].mxu0
        %v432 = vadd.f32 0.0, %v431
        %v433 = vpop.f32.mrb[0].mxu0
        %434 = vdwg.mxu0
        %v435 = vlaneseq
        %v436 = vand.u32 %v435, 127
        %vm437 = vcmp.lt.s32.totalorder %v436, 8
        %v438 = vsel %vm437, %v432, -1e+30
        %v439 = vld [vmem:[#allocation2] sm:$0xff]
        %440 = vmax.xlane.f32.xlu0 %v438
        %v441 = vpop.xlane.xlu0 %440
        %v442 = vmax.f32 %v439, %v441
        %v443 = vsub.f32 %v439, %v442
        %v444 = vmul.f32 %v443, 1.442695
        %v445 = vpow.pop %v444
        %447 = vset.pattern.permute.xlu0 0
        %448 = vperm.xlu0 %447, %v442
        %v449 = vpop.permute.xlu0 %448
        %v451 = vsub.f32 %v438, %v449
        %v452 = vmul.f32 %v451, 1.442695
        %v453 = vpow.pop %v452
        %v454 = vld [vmem:[#allocation3] sm:$0xff]
        %v455 = vmul.f32 %v445, %v454
        %456 = vadd.xlane.f32.xlu0 %v453
        %v457 = vpop.xlane.xlu0 %456
        %v458 = vadd.f32 %v455, %v457
        %vm459 = vcmask 7168
        %460 = vst.msk [vmem:[#allocation3] sm:$0xff] %vm459, %v458
        %v461 = vld [vmem:[#allocation4] sm:$0xff]
        %463 = vset.pattern.permute.xlu0 0
        %464 = vperm.xlu0 %463, %v445
        %v465 = vpop.permute.xlu0 %464
        %v467 = vmul.f32 %v465, %v461
        %468 = vmatprep.subr.mxu0 0.0
        %469 = vmatpush1.msra.mxu0 %v297
        %470 = vmatprep.subr.mxu0 0.0
        %471 = vmatpush1.msra.mxu0 %v298
        %472 = vmatprep.subr.mxu0 0.0
        %473 = vmatpush1.msra.mxu0 %v299
        %474 = vmatprep.subr.mxu0 0.0
        %475 = vmatpush1.msra.mxu0 %v300
        %476 = vmatprep.subr.mxu0 0.0
        %477 = vmatpush1.msra.mxu0 %v301
        %478 = vmatprep.subr.mxu0 0.0
        %479 = vmatpush1.msra.mxu0 %v302
        %480 = vmatprep.subr.mxu0 0.0
        %481 = vmatpush1.msra.mxu0 %v303
        %482 = vmatprep.subr.mxu0 0.0
        %483 = vmatpush1.msra.mxu0 %v304
        %484 = vmatprep.subr.mxu0 0.0
        %485 = vmatpush1.msra.mxu0 %v305
        %486 = vmatprep.subr.mxu0 0.0
        %487 = vmatpush1.msra.mxu0 %v306
        %488 = vmatprep.subr.mxu0 0.0
        %489 = vmatpush1.msra.mxu0 %v307
        %490 = vmatprep.subr.mxu0 0.0
        %491 = vmatpush1.msra.mxu0 %v308
        %492 = vmatprep.subr.mxu0 0.0
        %493 = vmatpush1.msra.mxu0 %v309
        %494 = vmatprep.subr.mxu0 0.0
        %495 = vmatpush1.msra.mxu0 %v310
        %496 = vmatprep.subr.mxu0 0.0
        %497 = vmatpush1.msra.mxu0 %v311
        %498 = vmatprep.subr.mxu0 0.0
        %499 = vmatpush1.msra.mxu0 %v312
        %500 = vmatprep.subr.mxu0 0.0
        %501 = vmatpush1.msra.mxu0 0.0
        %502 = vmatprep.subr.mxu0 0.0
        %503 = vmatpush1.msra.mxu0 0.0
        %504 = vmatprep.subr.mxu0 0.0
        %505 = vmatpush1.msra.mxu0 0.0
        %506 = vmatprep.subr.mxu0 0.0
        %507 = vmatpush1.msra.mxu0 0.0
        %508 = vmatprep.subr.mxu0 0.0
        %509 = vmatpush1.msra.mxu0 0.0
        %510 = vmatprep.subr.mxu0 0.0
        %511 = vmatpush1.msra.mxu0 0.0
        %512 = vmatprep.subr.mxu0 0.0
        %513 = vmatpush1.msra.mxu0 0.0
        %514 = vmatprep.subr.mxu0 0.0
        %515 = vmatpush1.msra.mxu0 0.0
        %516 = vmatprep.subr.mxu0 0.0
        %517 = vmatpush1.msra.mxu0 0.0
        %518 = vmatprep.subr.mxu0 0.0
        %519 = vmatpush1.msra.mxu0 0.0
        %520 = vmatprep.subr.mxu0 0.0
        %521 = vmatpush1.msra.mxu0 0.0
        %522 = vmatprep.subr.mxu0 0.0
        %523 = vmatpush1.msra.mxu0 0.0
        %524 = vmatprep.subr.mxu0 0.0
        %525 = vmatpush1.msra.mxu0 0.0
        %526 = vmatprep.subr.mxu0 0.0
        %527 = vmatpush1.msra.mxu0 0.0
        %528 = vmatprep.subr.mxu0 0.0
        %529 = vmatpush1.msra.mxu0 0.0
        %530 = vmatprep.subr.mxu0 0.0
        %531 = vmatpush1.msra.mxu0 0.0
        %532 = vmatprep.mubr.f32.mxu0 0.0
        %533 = vmatmul.mubr.f32.gmra.mrb[0].mxu0 %v453
        %v534 = vpop.f32.mrb[0].mxu0
        %v535 = vadd.f32 0.0, %v534
        %v536 = vpop.f32.mrb[0].mxu0
        %537 = vdwg.mxu0
        %v538 = vadd.f32 %v467, %v535
        %539 = vst.msk [vmem:[#allocation4] sm:$0xff] %vm313, %v538
        %540 = vst.msk [vmem:[#allocation2] sm:$0xff] %vm459, %v442
        // Predicated region
        $region37: #{tpu_custom_call.1} parent=31 // pred_check
          %p541 = pneg %p270
        $region38: #{tpu_custom_call.1} parent=31 // pred_check_branch
          %543 = sbr.rel (%p541) target = $region40
        $region39: #{tpu_custom_call.1} parent=31 // pred_region
          %v544 = vld [vmem:[#allocation3] sm:$0xff]
          %v545 = vrcp.pop %v544
          %v546 = vld [vmem:[#allocation4] sm:$0xff]
          %548 = vset.pattern.permute.xlu0 0
          %549 = vperm.xlu0 %548, %v545
          %v550 = vpop.permute.xlu0 %549
          %v552 = vmul.f32 %v546, %v550
          %553 = vst.msk [vmem:[%s242] sm:$0xff] %vm313, %v552
        $region40: #{tpu_custom_call.1} parent=31 // pred_fallthru
          _
        %s554 = sand.u32 %s130, 1
        %s555 = scalar_lea.sflag [#allocation6], %s554
        %s556 = sand.u32 %s130, 1
        %s557 = smul.addr %s556, 8
        %s558 = scalar_lea.vmem [#allocation5], %s557
        // Predicated region
        $region41: #{tpu_custom_call.1} parent=31 // pred_check
          %p559 = pneg %p140
        $region42: #{tpu_custom_call.1} parent=31 // pred_check_branch
          %561 = sbr.rel (%p559) target = $region44
        $region43: #{tpu_custom_call.1} parent=31 // pred_region
          %s563 = ssub.s32 128, 128
          %564 = vsyncadd %s555, %s563
          %s565 = sadd.s32 %s23, %s22
          %s566 = smul.addr %s565, 128
          %s567 = scalar_lea.hbm %s3, %s566
          %s569 = sshll.u32 %s558, 4
          %s570 = int_to_ptr.vmem [resolvable:$true] %s569
          %572 = dma.vmem_to_hbm [thread:$0]  %s570, 128, %s567, %s555
        $region44: #{tpu_custom_call.1} parent=31 // pred_fallthru
          _
      $region32: #{tpu_custom_call.1} parent=5 // pred_fallthru
        _
      %p573 = scmp.le.s32.totalorder 2, %s12
      // Predicated region
      $region45: #{tpu_custom_call.1} parent=5 // pred_check
        %p574 = pneg %p573
      $region46: #{tpu_custom_call.1} parent=5 // pred_check_branch
        %576 = sbr.rel (%p574) target = $region48
      $region47: #{tpu_custom_call.1} parent=5 // pred_region
        %s577 = ssub.s32 %s12, 2
        // Predicated region
        $region49: #{tpu_custom_call.1} parent=47 // pred_check
          %p578 = pneg %p146
        $region50: #{tpu_custom_call.1} parent=47 // pred_check_branch
          %580 = sbr.rel (%p578) target = $region52
        $region51: #{tpu_custom_call.1} parent=47 // pred_region
          %s581 = sand.u32 %s131, 1
          %s582 = scalar_lea.sflag [#allocation6], %s581
          %s583 = sand.u32 %s131, 1
          %s584 = smul.addr %s583, 8
          %s585 = scalar_lea.vmem [#allocation5], %s584
          %586 = dma.done %s582, 128
        $region52: #{tpu_custom_call.1} parent=47 // pred_fallthru
          _
      $region48: #{tpu_custom_call.1} parent=5 // pred_fallthru
        _
    $region6: #{tpu_custom_call.1} parent=1 // loop_footer
      %s16 = sadd.s32 1, %s12
    $region7: #{tpu_custom_call.1} parent=1 // loop_footer_branch
      %11 = sbr.rel target = $region3
    $region8: #{tpu_custom_call.1} parent=1 // loop_exit
      _
    %587 = vsyncpa [#allocation6], 1
    %s588 = scalar_lea.sflag [#allocation6], 1
    %589 = vsyncpa %s588, 1

</llo_original>
